<compile_context>
chip_gen: v7x
topology: tpu7x:2x2x1
jax: 0.10.0
libtpu: 0.0.40
codegen_flags: <defaults>
</compile_context>

<pallas_src>
import math
from functools import partial

import jax
import jax.numpy as jnp
from jax.experimental import pallas as pl
from jax.experimental.pallas import tpu as pltpu


def _round_up(x, m):
    return ((x + m - 1) // m) * m


def _pick_block_batch(B, S, target_rows=512):
    """Largest divisor of B whose row tile (bb*S) stays small and sublane-aligned.
    Prefers an even grid length (v7x megacore) when it doesn't shrink the row block."""
    cands = [bb for bb in range(1, B + 1)
             if B % bb == 0 and (bb == B or (bb * S) % 16 == 0)]
    small = [bb for bb in cands if bb * S <= max(target_rows, S)] or [min(cands)]
    even = [bb for bb in small if (B // bb) % 2 == 0 and (B // bb) >= 2]
    return max(even) if even else max(small)


def mhla_kernel(decay_ref, x_ref, wkvdown_ref, wqabs_ref, wov_ref,
                out_ref, lat_ref, *, num_heads, seq_len, approx_recip):
    rows = x_ref.shape[0]                 # bb * S rows of this grid step
    bt = rows // seq_len                  # batch rows processed per step (static)
    lpad = wkvdown_ref.shape[1]           # padded latent width (>= 128)
    cdt = x_ref.dtype                     # MXU compute dtype (bf16 or f32)

    x = x_ref[...]                        # (rows, D) in compute dtype

    # Fused latent projection: lat = x @ [W_down (W_k + W_v)]^T  (f32 accumulation).
    lat_f32 = jnp.dot(x, wkvdown_ref[...], preferred_element_type=jnp.float32)
    lat_ref[...] = lat_f32.astype(lat_ref.dtype)
    lat3 = lat_f32.astype(cdt).reshape(bt, seq_len, lpad)      # shared K and V source

    decay = decay_ref[...].astype(jnp.float32)                 # (S, S), hoisted to wrapper

    def head_body(h, acc):
        # Absorbed query: q_abs_h = x @ (W_q^T[:,c] W_up_k[c,:] / sqrt(D))  -> (rows, L_pad)
        q_abs = jnp.dot(x, wqabs_ref[h], preferred_element_type=jnp.float32)
        q3 = q_abs.astype(cdt).reshape(bt, seq_len, lpad)

        # Scores contract over L_pad >= 128 (good MXU fill even when dh < 128).
        s = jnp.einsum('bql,bkl->bqk', q3, lat3,
                       preferred_element_type=jnp.float32)     # (bt, S, S)
        s = s * decay

        # Numerically stable softmax; elementwise math kept in f32 (v5e-safe).
        s = s - jnp.max(s, axis=-1, keepdims=True)
        e = jnp.exp(s)
        attn = (e * pl.reciprocal(jnp.sum(e, axis=-1, keepdims=True),
                                  approx=approx_recip)).astype(cdt)

        # ctx_h = attn @ lat; output contribution ctx_h @ (W_up_v^T[:,c] W_o^T[c,:]).
        ctx = jnp.einsum('bqk,bkl->bql', attn, lat3,
                         preferred_element_type=jnp.float32)   # (bt, S, L_pad)
        return acc + jnp.dot(ctx.reshape(rows, lpad).astype(cdt), wov_ref[h],
                             preferred_element_type=jnp.float32)

    acc0 = jnp.zeros((rows, out_ref.shape[1]), jnp.float32)
    acc = jax.lax.fori_loop(0, num_heads, head_body, acc0)
    out_ref[...] = acc.astype(out_ref.dtype)                   # lane-dense (rows, D_pad) store


def mhla_forward(x, params, *, num_heads, lambda_decay,
                 compute_dtype=jnp.bfloat16, out_dtype=jnp.float32,
                 block_batch=None):
    """x: (B, S, D) f32. params: dict of PyTorch-convention (out, in) weights.
    Returns (output (B,S,D), latent_kv (B,S,L)) — matches the module with memory=None."""
    B, S, D = x.shape
    H = num_heads
    L = params["W_down_kv"].shape[0]
    assert D % H == 0, "d_model must be divisible by num_heads"
    dh = D // H

    f32 = jnp.float32
    cdt = jnp.dtype(compute_dtype)
    approx_recip = cdt != jnp.dtype(f32)

    D_pad = _round_up(D, 128)             # lane-dense output stores
    L_pad = _round_up(L, 128)             # lane-dense latent / >=128-deep attention contractions

    Wq = params["W_q"].astype(f32)
    Wk = params["W_k"].astype(f32)
    Wv = params["W_v"].astype(f32)
    Wo = params["W_o"].astype(f32)
    Wdown = params["W_down_kv"].astype(f32)      # (L, D)
    Wupk = params["W_up_k"].astype(f32)          # (D, L)
    Wupv = params["W_up_v"].astype(f32)          # (D, L)

    # (1) Fused latent weight: lat = x @ [(W_k + W_v)^T W_down^T]           -> (D, L)
    w_kvdown = (Wk + Wv).T @ Wdown.T
    # (2) Absorbed per-head query weight (W_q, W_up_k and 1/sqrt(D) folded) -> (H, D, L)
    wq_abs = jnp.einsum('dhc,hcl->hdl',
                        Wq.T.reshape(D, H, dh), Wupk.reshape(H, dh, L)) / math.sqrt(D)
    # (3) Absorbed per-head output weight (W_up_v folded into W_o)          -> (H, L, D)
    w_ov = jnp.einsum('lhc,hcd->hld',
                      Wupv.T.reshape(L, H, dh), Wo.T.reshape(H, dh, D))

    # Zero-pad to lane-dense widths (padding is exact — extra rows/cols are zero).
    w_kvdown = jnp.pad(w_kvdown, ((0, 0), (0, L_pad - L))).astype(cdt)
    wq_abs = jnp.pad(wq_abs, ((0, 0), (0, 0), (0, L_pad - L))).astype(cdt)
    w_ov = jnp.pad(w_ov, ((0, 0), (0, L_pad - L), (0, D_pad - D))).astype(cdt)

    # Batch-invariant time-decay matrix, hoisted out of the kernel. bf16 DMA on the bf16
    # path when S is sublane-packable; f32 otherwise (and always on the f32 check path).
    t = jnp.arange(S, dtype=f32)
    decay = jnp.exp(-lambda_decay * jnp.abs(t[:, None] - t[None, :]))
    decay_dtype = cdt if (approx_recip and S % 16 == 0) else f32
    decay = decay.astype(decay_dtype)

    # Several batch rows per grid step so projections see many rows per MXU matmul.
    bb = _pick_block_batch(B, S) if block_batch is None else block_batch
    assert B % bb == 0
    rows = bb * S
    grid = (B // bb,)

    x_flat = x.reshape(B * S, D).astype(cdt)

    kernel = partial(mhla_kernel, num_heads=H, seq_len=S, approx_recip=approx_recip)

    # Explicit VMEM budget from the actual resident set (+50% headroom), capped so it is
    # also valid on v7x's 64 MiB VMEM.
    cbytes = jnp.dtype(cdt).itemsize
    obytes = jnp.dtype(out_dtype).itemsize
    resident = (
        2 * rows * D * cbytes                                             # x (double-buffered)
        + 2 * rows * (D_pad + L_pad) * obytes                             # outputs (double-buf)
        + 2 * S * S * jnp.dtype(decay_dtype).itemsize                     # decay
        + 2 * (D * L_pad + H * D * L_pad + H * L_pad * D_pad) * cbytes    # weights
        + rows * (D_pad + 2 * L_pad) * 4                                  # acc + f32 temps
        + 3 * bb * S * S * 4                                              # score/exp temps
    )
    vmem_limit = int(min(56 * 2**20, max(32 * 2**20, int(1.5 * resident))))

    # Advisory cost estimate for the XLA scheduler.
    flops = int(2 * B * S * (D * L_pad
                             + H * (D * L_pad + 2 * S * L_pad + L_pad * D_pad)))
    transcendentals = int(B * H * S * S)
    bytes_accessed = int(
        x_flat.size * x_flat.dtype.itemsize
        + decay.size * decay.dtype.itemsize
        + sum(int(w.size * w.dtype.itemsize) for w in (w_kvdown, wq_abs, w_ov))
        + B * S * (D_pad + L_pad) * obytes)

    const = lambda shape: pl.BlockSpec(shape, lambda g: (0,) * len(shape))

    out_flat, lat_flat = pl.pallas_call(
        kernel,
        out_shape=(jax.ShapeDtypeStruct((B * S, D_pad), out_dtype),
                   jax.ShapeDtypeStruct((B * S, L_pad), out_dtype)),
        grid=grid,
        in_specs=[
            const((S, S)),                                    # decay (batch-invariant)
            pl.BlockSpec((rows, D), lambda g: (g, 0)),        # x rows for this step
            const((D, L_pad)),                                # fused W_kv_down
            const((H, D, L_pad)),                             # absorbed W_q (per head)
            const((H, L_pad, D_pad)),                         # absorbed W_o (per head)
        ],
        out_specs=(
            pl.BlockSpec((rows, D_pad), lambda g: (g, 0)),
            pl.BlockSpec((rows, L_pad), lambda g: (g, 0)),
        ),
        compiler_params=pltpu.CompilerParams(
            dimension_semantics=("parallel",),
            vmem_limit_bytes=vmem_limit),
        cost_estimate=pl.CostEstimate(flops=flops, transcendentals=transcendentals,
                                      bytes_accessed=bytes_accessed),
    )(decay, x_flat, w_kvdown, wq_abs, w_ov)

    out = out_flat.reshape(B, S, D_pad)[..., :D]
    lat = lat_flat.reshape(B, S, L_pad)[..., :L]
    return out, lat


def mhla_reference(x, params, *, num_heads, lambda_decay):
    """Pure-JAX f32 reference matching the PyTorch module (memory=None)."""
    B, S, D = x.shape
    dh = D // num_heads
    q = x @ params["W_q"].T
    k = x @ params["W_k"].T
    v = x @ params["W_v"].T
    lat = (k + v) @ params["W_down_kv"].T
    k_rec = lat @ params["W_up_k"].T
    v_rec = lat @ params["W_up_v"].T

    def split_heads(t):  # (B,S,D) -> (B,H,S,dh)
        return t.reshape(B, S, num_heads, dh).transpose(0, 2, 1, 3)

    qh, kh, vh = split_heads(q), split_heads(k_rec), split_heads(v_rec)
    scores = jnp.einsum("bhqd,bhkd->bhqk", qh, kh) / math.sqrt(D)
    t = jnp.arange(S, dtype=jnp.float32)
    decay = jnp.exp(-lambda_decay * jnp.abs(t[:, None] - t[None, :]))
    scores = scores * decay[None, None]
    w = jax.nn.softmax(scores, axis=-1)
    o = jnp.einsum("bhqk,bhkd->bhqd", w, vh)
    o = o.transpose(0, 2, 1, 3).reshape(B, S, D)
    return o @ params["W_o"].T, lat


def init_params(key, d_model, d_latent):
    """Deterministic init mimicking nn.Linear default (uniform +-1/sqrt(fan_in))."""
    shapes = {
        "W_q": (d_model, d_model),
        "W_k": (d_model, d_model),
        "W_v": (d_model, d_model),
        "W_o": (d_model, d_model),
        "W_down_kv": (d_latent, d_model),
        "W_up_k": (d_model, d_latent),
        "W_up_v": (d_model, d_latent),
    }
    params = {}
    keys = jax.random.split(key, len(shapes))
    for k_, (name, shape) in zip(keys, sorted(shapes.items())):
        bound = 1.0 / math.sqrt(shape[1])
        params[name] = jax.random.uniform(k_, shape, jnp.float32, -bound, bound)
    return params


if __name__ == "__main__":
    B, S, D, H, L = 2, 8, 32, 4, 16
    lambda_decay = 0.01

    key = jax.random.PRNGKey(0)
    kx, kp = jax.random.split(key)
    x = jax.random.normal(kx, (B, S, D), jnp.float32)
    params = init_params(kp, D, L)

    ref_out, ref_lat = mhla_reference(x, params, num_heads=H, lambda_decay=lambda_decay)

    # f32 compute path: tight check against the f32 reference (exact divide in softmax).
    out32, lat32 = mhla_forward(x, params, num_heads=H, lambda_decay=lambda_decay,
                                compute_dtype=jnp.float32)
    out32 = jax.block_until_ready(out32)
    lat32 = jax.block_until_ready(lat32)
    assert out32.shape == (B, S, D) and lat32.shape == (B, S, L)
    assert jnp.allclose(out32, ref_out, atol=5e-3, rtol=5e-3), "f32 output mismatch"
    assert jnp.allclose(lat32, ref_lat, atol=5e-3, rtol=5e-3), "f32 latent mismatch"

    # Default bf16 MXU path (f32 accumulation): looser tolerance vs. the f32 reference.
    out16, lat16 = mhla_forward(x, params, num_heads=H, lambda_decay=lambda_decay)
    out16 = jax.block_until_ready(out16)
    assert jnp.allclose(out16, ref_out, atol=3e-2, rtol=3e-2), "bf16 output mismatch"
    assert jnp.allclose(lat16, ref_lat, atol=3e-2, rtol=3e-2), "bf16 latent mismatch"

    # A second, MXU-friendly config (lane-aligned D, longer S) to exercise the same kernel.
    B2, S2, D2, H2, L2 = 2, 128, 128, 4, 64
    x2 = jax.random.normal(jax.random.PRNGKey(1), (B2, S2, D2), jnp.float32)
    params2 = init_params(jax.random.PRNGKey(2), D2, L2)
    o2, l2 = mhla_forward(x2, params2, num_heads=H2, lambda_decay=lambda_decay)
    o2 = jax.block_until_ready(o2)
    r_o2, r_l2 = mhla_reference(x2, params2, num_heads=H2, lambda_decay=lambda_decay)
    assert jnp.allclose(o2, r_o2, atol=3e-2, rtol=3e-2), "bf16 output mismatch (cfg2)"
    assert jnp.allclose(l2, r_l2, atol=3e-2, rtol=3e-2), "bf16 latent mismatch (cfg2)"

    print("KERNEL_OK")
</pallas_src>

<mosaic_0001>
module attributes {stable_mosaic.version = 11 : i64} {
  func.func @mhla_kernel(%arg0: i32, %arg1: memref<8x8xf32, #tpu.memory_space<vmem>>, %arg2: memref<16x32xf32, #tpu.memory_space<vmem>>, %arg3: memref<32x128xf32, #tpu.memory_space<vmem>>, %arg4: memref<4x32x128xf32, #tpu.memory_space<vmem>>, %arg5: memref<4x128x128xf32, #tpu.memory_space<vmem>>, %arg6: memref<16x128xf32, #tpu.memory_space<vmem>>, %arg7: memref<16x128xf32, #tpu.memory_space<vmem>>) attributes {dimension_semantics = [#tpu.dimension_semantics<parallel>], iteration_bounds = array<i64: 1>, scalar_prefetch = 0 : i64, scratch_operands = 0 : i64, tpu.core_type = #tpu.core_type<tc>, window_params = [{pipeline_mode = #tpu.pipeline_mode<synchronous>, transform_indices = @transform_0, window_bounds = array<i64: 8, 8>}, {transform_indices = @transform_1, window_bounds = array<i64: 16, 32>}, {pipeline_mode = #tpu.pipeline_mode<synchronous>, transform_indices = @transform_2, window_bounds = array<i64: 32, 128>}, {pipeline_mode = #tpu.pipeline_mode<synchronous>, transform_indices = @transform_3, window_bounds = array<i64: 4, 32, 128>}, {pipeline_mode = #tpu.pipeline_mode<synchronous>, transform_indices = @transform_4, window_bounds = array<i64: 4, 128, 128>}, {transform_indices = @transform_5, window_bounds = array<i64: 16, 128>}, {transform_indices = @transform_6, window_bounds = array<i64: 16, 128>}]} {
    %c0 = arith.constant 0 : index
    %c0_0 = arith.constant 0 : index
    %0 = vector.load %arg2[%c0, %c0_0] : memref<16x32xf32, #tpu.memory_space<vmem>>, vector<16x32xf32>
    %c0_1 = arith.constant 0 : index
    %c0_2 = arith.constant 0 : index
    %1 = vector.load %arg3[%c0_1, %c0_2] : memref<32x128xf32, #tpu.memory_space<vmem>>, vector<32x128xf32>
    %cst = arith.constant dense<0.000000e+00> : vector<16x128xf32>
    %2 = tpu.matmul %0, %1, %cst {dimension_numbers = #tpu.dot_dimension_numbers<[1], [0], [0], [1], [0, 0, 1, 1], [], []>} : vector<16x32xf32>, vector<32x128xf32>, vector<16x128xf32> -> vector<16x128xf32>
    %c0_3 = arith.constant 0 : index
    %c0_4 = arith.constant 0 : index
    %3 = vector.load %arg7[%c0_3, %c0_4] : memref<16x128xf32, #tpu.memory_space<vmem>>, vector<16x128xf32>
    tpu.vector_store %arg7[%c0_3, %c0_4], %2 {strides = array<i32>} : memref<16x128xf32, #tpu.memory_space<vmem>>, vector<16x128xf32>,
    %4 = vector.shape_cast %2 : vector<16x128xf32> to vector<2x8x128xf32>
    %c0_5 = arith.constant 0 : index
    %c0_6 = arith.constant 0 : index
    %5 = vector.load %arg1[%c0_5, %c0_6] : memref<8x8xf32, #tpu.memory_space<vmem>>, vector<8x8xf32>
    %cst_7 = arith.constant 0.000000e+00 : f32
    %6 = vector.broadcast %cst_7 : f32 to vector<16x128xf32>
    %c0_i32 = arith.constant 0 : i32
    %c4_i32 = arith.constant 4 : i32
    %7 = arith.addi %c0_i32, %c4_i32 : i32
    %c1_i32 = arith.constant 1 : i32
    %8 = scf.for %arg8 = %c0_i32 to %7 step %c1_i32 iter_args(%arg9 = %6) -> (vector<16x128xf32>)  : i32 {
      %10 = arith.index_cast %arg8 : i32 to index
      %c0_11 = arith.constant 0 : index
      %c0_12 = arith.constant 0 : index
      %11 = vector.load %arg4[%10, %c0_11, %c0_12] : memref<4x32x128xf32, #tpu.memory_space<vmem>>, vector<1x32x128xf32>
      %12 = vector.shape_cast %11 : vector<1x32x128xf32> to vector<32x128xf32>
      %cst_13 = arith.constant dense<0.000000e+00> : vector<16x128xf32>
      %13 = tpu.matmul %0, %12, %cst_13 {dimension_numbers = #tpu.dot_dimension_numbers<[1], [0], [0], [1], [0, 0, 1, 1], [], []>} : vector<16x32xf32>, vector<32x128xf32>, vector<16x128xf32> -> vector<16x128xf32>
      %14 = vector.shape_cast %13 : vector<16x128xf32> to vector<2x8x128xf32>
      "tpu.trace_start"() <{level = 10 : i32, message = "bql,bkl->bqk"}> : () -> ()
      %cst_14 = arith.constant dense<0.000000e+00> : vector<2x8x8xf32>
      %15 = tpu.matmul %14, %4, %cst_14 {dimension_numbers = #tpu.dot_dimension_numbers<[2], [2], [1], [1], [0, 0, 0, 1, 1, 1], [0], [0]>} : vector<2x8x128xf32>, vector<2x8x128xf32>, vector<2x8x8xf32> -> vector<2x8x8xf32>
      "tpu.trace_stop"() : () -> ()
      %16 = vector.shape_cast %5 : vector<8x8xf32> to vector<1x8x8xf32>
      %17 = vector.broadcast %16 : vector<1x8x8xf32> to vector<2x8x8xf32>
      %18 = arith.mulf %15, %17 : vector<2x8x8xf32>
      %cst_15 = arith.constant dense<0xFF800000> : vector<2x8xf32>
      %19 = vector.multi_reduction <maximumf>, %18, %cst_15 [2] : vector<2x8x8xf32> to vector<2x8xf32>
      %20 = vector.shape_cast %19 : vector<2x8xf32> to vector<2x8x1xf32>
      %21 = vector.broadcast %20 : vector<2x8x1xf32> to vector<2x8x8xf32>
      %22 = arith.subf %18, %21 : vector<2x8x8xf32>
      %23 = math.exp %22 : vector<2x8x8xf32>
      %cst_16 = arith.constant dense<0.000000e+00> : vector<2x8xf32>
      %24 = vector.multi_reduction <add>, %23, %cst_16 [2] : vector<2x8x8xf32> to vector<2x8xf32>
      %25 = vector.shape_cast %24 : vector<2x8xf32> to vector<2x8x1xf32>
      %26 = tpu.reciprocal %25 : vector<2x8x1xf32> -> vector<2x8x1xf32>
      %27 = vector.broadcast %26 : vector<2x8x1xf32> to vector<2x8x8xf32>
      %28 = arith.mulf %23, %27 : vector<2x8x8xf32>
      "tpu.trace_start"() <{level = 10 : i32, message = "bqk,bkl->bql"}> : () -> ()
      %cst_17 = arith.constant dense<0.000000e+00> : vector<2x8x128xf32>
      %29 = tpu.matmul %28, %4, %cst_17 {dimension_numbers = #tpu.dot_dimension_numbers<[2], [1], [1], [2], [0, 0, 0, 1, 1, 2], [0], [0]>} : vector<2x8x8xf32>, vector<2x8x128xf32>, vector<2x8x128xf32> -> vector<2x8x128xf32>
      "tpu.trace_stop"() : () -> ()
      %30 = vector.shape_cast %29 : vector<2x8x128xf32> to vector<16x128xf32>
      %31 = arith.index_cast %arg8 : i32 to index
      %c0_18 = arith.constant 0 : index
      %c0_19 = arith.constant 0 : index
      %32 = vector.load %arg5[%31, %c0_18, %c0_19] : memref<4x128x128xf32, #tpu.memory_space<vmem>>, vector<1x128x128xf32>
      %33 = vector.shape_cast %32 : vector<1x128x128xf32> to vector<128x128xf32>
      %cst_20 = arith.constant dense<0.000000e+00> : vector<16x128xf32>
      %34 = tpu.matmul %30, %33, %cst_20 {dimension_numbers = #tpu.dot_dimension_numbers<[1], [0], [0], [1], [0, 0, 1, 1], [], []>} : vector<16x128xf32>, vector<128x128xf32>, vector<16x128xf32> -> vector<16x128xf32>
      %35 = arith.addf %arg9, %34 : vector<16x128xf32>
      scf.yield %35 : vector<16x128xf32>
    }
    %c4_i32_8 = arith.constant 4 : i32
    %c0_9 = arith.constant 0 : index
    %c0_10 = arith.constant 0 : index
    %9 = vector.load %arg6[%c0_9, %c0_10] : memref<16x128xf32, #tpu.memory_space<vmem>>, vector<16x128xf32>
    tpu.vector_store %arg6[%c0_9, %c0_10], %8 {strides = array<i32>} : memref<16x128xf32, #tpu.memory_space<vmem>>, vector<16x128xf32>,
    return
  }
  func.func @transform_0(%arg0: i32) -> (i32, i32) {
    %c0_i32 = arith.constant 0 : i32
    %c0_i32_0 = arith.constant 0 : i32
    %c0_i32_1 = arith.constant 0 : i32
    return %c0_i32, %c0_i32_0 : i32, i32
  }
  func.func @transform_1(%arg0: i32) -> (i32, i32) {
    %c0_i32 = arith.constant 0 : i32
    %c0_i32_0 = arith.constant 0 : i32
    return %arg0, %c0_i32 : i32, i32
  }
  func.func @transform_2(%arg0: i32) -> (i32, i32) {
    %c0_i32 = arith.constant 0 : i32
    %c0_i32_0 = arith.constant 0 : i32
    %c0_i32_1 = arith.constant 0 : i32
    return %c0_i32, %c0_i32_0 : i32, i32
  }
  func.func @transform_3(%arg0: i32) -> (i32, i32, i32) {
    %c0_i32 = arith.constant 0 : i32
    %c0_i32_0 = arith.constant 0 : i32
    %c0_i32_1 = arith.constant 0 : i32
    %c0_i32_2 = arith.constant 0 : i32
    return %c0_i32, %c0_i32_0, %c0_i32_1 : i32, i32, i32
  }
  func.func @transform_4(%arg0: i32) -> (i32, i32, i32) {
    %c0_i32 = arith.constant 0 : i32
    %c0_i32_0 = arith.constant 0 : i32
    %c0_i32_1 = arith.constant 0 : i32
    %c0_i32_2 = arith.constant 0 : i32
    return %c0_i32, %c0_i32_0, %c0_i32_1 : i32, i32, i32
  }
  func.func @transform_5(%arg0: i32) -> (i32, i32) {
    %c0_i32 = arith.constant 0 : i32
    %c0_i32_0 = arith.constant 0 : i32
    return %arg0, %c0_i32 : i32, i32
  }
  func.func @transform_6(%arg0: i32) -> (i32, i32) {
    %c0_i32 = arith.constant 0 : i32
    %c0_i32_0 = arith.constant 0 : i32
    return %arg0, %c0_i32 : i32, i32
  }
}

</mosaic_0001>

<llo_original>
// kernel: tpu_custom_call.1
$region0: #{tpu_custom_call.1}
  #allocation0 [shape = 'u32[]', space=smem, size = 0x4, offset = 0x4, fixed_abs, tag = 'smem constant byte address 0x4 - core index']
  #allocation1 [shape = 'u32[144,128]{1,0:T(1,128)}', space=vmem, size = 0x12000, scoped, tag = 'internal scratch']
  %s0 = inlined_call_operand.hbm [shape: f32[8,8], index: 0, kind: input, shape index: {}]
  %s1 = inlined_call_operand.hbm [shape: f32[16,32], index: 1, kind: input, shape index: {}]
  %s2 = inlined_call_operand.hbm [shape: f32[32,128], index: 2, kind: input, shape index: {}]
  %s3 = inlined_call_operand.hbm [shape: f32[4,32,128], index: 3, kind: input, shape index: {}]
  %s4 = inlined_call_operand.hbm [shape: f32[4,128,128], index: 4, kind: input, shape index: {}]
  %s5 = inlined_call_operand.hbm [shape: f32[16,128], index: 5, kind: output, shape index: {0}]
  %s6 = inlined_call_operand.hbm [shape: f32[16,128], index: 6, kind: output, shape index: {1}]
  %7 = xla_tuple %s5, %s6
  %s8 = sld [smem:[#allocation0]]
  $region65: #{tpu_custom_call.1} parent=0
    _
  %s10 = ssub.s32 1, %s8
  %s11 = scalar_select 0, %s10, %s8
  $region1: #{tpu_custom_call.1} parent=0
    #allocation2 [shape = 'u8[4096]{0}', space=vmem, size = 0x1000, scoped, tag = 'input window, operand 0, single buffered']
    #allocation3 [shape = 's32[1]{0}', space=sflag, size = 0x4, scoped, tag = 'scoped memory for tpu_custom_call.1']
    #allocation4 [shape = 's32[1]{0}', space=sflag, size = 0x4, scoped, tag = 'scoped memory for tpu_custom_call.1']
    #allocation5 [shape = 'u8[8192]{0}', space=vmem, size = 0x2000, scoped, tag = 'input window, operand 1, single buffered']
    #allocation6 [shape = 's32[1]{0}', space=sflag, size = 0x4, scoped, tag = 'scoped memory for tpu_custom_call.1']
    #allocation7 [shape = 'u8[16384]{0}', space=vmem, size = 0x4000, scoped, tag = 'input window, operand 2, single buffered']
    #allocation8 [shape = 'u8[65536]{0}', space=vmem, size = 0x10000, scoped, tag = 'input window, operand 3, single buffered']
    #allocation9 [shape = 's32[1]{0}', space=sflag, size = 0x4, scoped, tag = 'scoped memory for tpu_custom_call.1']
    #allocation10 [shape = 'u8[262144]{0}', space=vmem, size = 0x40000, scoped, tag = 'input window, operand 4, single buffered']
    #allocation11 [shape = 'u8[8192]{0}', space=vmem, size = 0x2000, scoped, tag = 'output window, operand 0, single buffered']
    #allocation12 [shape = 'u8[8192]{0}', space=vmem, size = 0x2000, scoped, tag = 'output window, operand 1, single buffered']
    #allocation13 [shape = 's32[1]{0}', space=sflag, size = 0x4, scoped, tag = 'scoped memory for tpu_custom_call.1']
    %12 = vsyncpa [#allocation3], 0
    %13 = vsyncpa [#allocation6], 0
    %14 = vsyncpa [#allocation9], 0
    %15 = vsyncpa [#allocation4], 0
    %16 = vsyncpa [#allocation13], 0
    // Predicated region
    $region2: #{tpu_custom_call.1} parent=1 // pred_check
      _
    $region3: #{tpu_custom_call.1} parent=1 // pred_check_branch
      %18 = sbr.rel (0) target = $region5
    $region4: #{tpu_custom_call.1} parent=1 // pred_region
      %s20 = ssub.s32 128, 128
      %21 = vsyncadd [#allocation3], %s20
      %s23 = sshll.u32 [#allocation2], 4
      %s24 = int_to_ptr.vmem [resolvable:$true] %s23
      %26 = dma.hbm_to_vmem [thread:$0]  %s0, 128, %s24, [#allocation3]
    $region5: #{tpu_custom_call.1} parent=1 // pred_fallthru
      _
    // Predicated region
    $region6: #{tpu_custom_call.1} parent=1 // pred_check
      _
    $region7: #{tpu_custom_call.1} parent=1 // pred_check_branch
      %28 = sbr.rel (0) target = $region9
    $region8: #{tpu_custom_call.1} parent=1 // pred_region
      %s30 = ssub.s32 256, 256
      %31 = vsyncadd [#allocation6], %s30
      %s32 = sshll.u32 [#allocation5], 4
      %s33 = int_to_ptr.vmem [resolvable:$true] %s32
      %38 = dma.hbm_to_vmem [thread:$0]  %s1, 256, %s33, [#allocation6], 128, 128, 8
    $region9: #{tpu_custom_call.1} parent=1 // pred_fallthru
      _
    // Predicated region
    $region10: #{tpu_custom_call.1} parent=1 // pred_check
      _
    $region11: #{tpu_custom_call.1} parent=1 // pred_check_branch
      %40 = sbr.rel (0) target = $region13
    $region12: #{tpu_custom_call.1} parent=1 // pred_region
      %s42 = ssub.s32 512, 512
      %43 = vsyncadd [#allocation6], %s42
      %s44 = sshll.u32 [#allocation7], 4
      %s45 = int_to_ptr.vmem [resolvable:$true] %s44
      %50 = dma.hbm_to_vmem [thread:$0]  %s2, 512, %s45, [#allocation6], 128, 128, 8
    $region13: #{tpu_custom_call.1} parent=1 // pred_fallthru
      _
    // Predicated region
    $region14: #{tpu_custom_call.1} parent=1 // pred_check
      _
    $region15: #{tpu_custom_call.1} parent=1 // pred_check_branch
      %52 = sbr.rel (0) target = $region17
    $region16: #{tpu_custom_call.1} parent=1 // pred_region
      %s54 = ssub.s32 2048, 2048
      %55 = vsyncadd [#allocation9], %s54
      %s56 = sshll.u32 [#allocation8], 4
      %s57 = int_to_ptr.vmem [resolvable:$true] %s56
      %62 = dma.hbm_to_vmem [thread:$0]  %s3, 2048, %s57, [#allocation9], 128, 128, 8
    $region17: #{tpu_custom_call.1} parent=1 // pred_fallthru
      _
    // Predicated region
    $region18: #{tpu_custom_call.1} parent=1 // pred_check
      _
    $region19: #{tpu_custom_call.1} parent=1 // pred_check_branch
      %64 = sbr.rel (0) target = $region21
    $region20: #{tpu_custom_call.1} parent=1 // pred_region
      %s66 = ssub.s32 8192, 8192
      %67 = vsyncadd [#allocation9], %s66
      %s68 = sshll.u32 [#allocation10], 4
      %s69 = int_to_ptr.vmem [resolvable:$true] %s68
      %74 = dma.hbm_to_vmem [thread:$0]  %s4, 8192, %s69, [#allocation9], 128, 128, 8
    $region21: #{tpu_custom_call.1} parent=1 // pred_fallthru
      _
    // Predicated region
    $region22: #{tpu_custom_call.1} parent=1 // pred_check
      _
    $region23: #{tpu_custom_call.1} parent=1 // pred_check_branch
      %76 = sbr.rel (0) target = $region25
    $region24: #{tpu_custom_call.1} parent=1 // pred_region
      %77 = dma.done [#allocation3], 128
    $region25: #{tpu_custom_call.1} parent=1 // pred_fallthru
      _
    // Predicated region
    $region26: #{tpu_custom_call.1} parent=1 // pred_check
      _
    $region27: #{tpu_custom_call.1} parent=1 // pred_check_branch
      %79 = sbr.rel (0) target = $region29
    $region28: #{tpu_custom_call.1} parent=1 // pred_region
      %80 = dma.done [#allocation6], 256
    $region29: #{tpu_custom_call.1} parent=1 // pred_fallthru
      _
    // Predicated region
    $region30: #{tpu_custom_call.1} parent=1 // pred_check
      _
    $region31: #{tpu_custom_call.1} parent=1 // pred_check_branch
      %82 = sbr.rel (0) target = $region33
    $region32: #{tpu_custom_call.1} parent=1 // pred_region
      %83 = dma.done [#allocation6], 512
    $region33: #{tpu_custom_call.1} parent=1 // pred_fallthru
      _
    // Predicated region
    $region34: #{tpu_custom_call.1} parent=1 // pred_check
      _
    $region35: #{tpu_custom_call.1} parent=1 // pred_check_branch
      %85 = sbr.rel (0) target = $region37
    $region36: #{tpu_custom_call.1} parent=1 // pred_region
      %86 = dma.done [#allocation9], 2048
    $region37: #{tpu_custom_call.1} parent=1 // pred_fallthru
      _
    // Predicated region
    $region38: #{tpu_custom_call.1} parent=1 // pred_check
      _
    $region39: #{tpu_custom_call.1} parent=1 // pred_check_branch
      %88 = sbr.rel (0) target = $region41
    $region40: #{tpu_custom_call.1} parent=1 // pred_region
      %89 = dma.done [#allocation9], 8192
    $region41: #{tpu_custom_call.1} parent=1 // pred_fallthru
      _
    %v90 = vld [vmem:[#allocation5] sm:$0xff]
    %v91 = vld [vmem:[#allocation5 + $0x8] sm:$0xff]
    %v92 = vld [vmem:[#allocation7] sm:$0xff]
    %v93 = vld [vmem:[#allocation7 + $0x8] sm:$0xff]
    %v94 = vld [vmem:[#allocation7 + $0x10] sm:$0xff]
    %v95 = vld [vmem:[#allocation7 + $0x18] sm:$0xff]
    %vm96 = vcmask 261120
    %v98 = vsel %vm96, %v90, 0
    %v101 = vsel %vm96, %v91, 0
    %103 = vmatprep.subr.mxu0 0.0
    %104 = vmatpush1.msra.mxu0 %v92
    %105 = vmatprep.subr.mxu0 0.0
    %106 = vmatpush1.msra.mxu0 %v93
    %107 = vmatprep.subr.mxu0 0.0
    %108 = vmatpush1.msra.mxu0 %v94
    %109 = vmatprep.subr.mxu0 0.0
    %110 = vmatpush1.msra.mxu0 %v95
    %111 = vmatprep.subr.mxu0 0.0
    %112 = vmatpush1.msra.mxu0 0.0
    %113 = vmatprep.subr.mxu0 0.0
    %114 = vmatpush1.msra.mxu0 0.0
    %115 = vmatprep.subr.mxu0 0.0
    %116 = vmatpush1.msra.mxu0 0.0
    %117 = vmatprep.subr.mxu0 0.0
    %118 = vmatpush1.msra.mxu0 0.0
    %119 = vmatprep.subr.mxu0 0.0
    %120 = vmatpush1.msra.mxu0 0.0
    %121 = vmatprep.subr.mxu0 0.0
    %122 = vmatpush1.msra.mxu0 0.0
    %123 = vmatprep.subr.mxu0 0.0
    %124 = vmatpush1.msra.mxu0 0.0
    %125 = vmatprep.subr.mxu0 0.0
    %126 = vmatpush1.msra.mxu0 0.0
    %127 = vmatprep.subr.mxu0 0.0
    %128 = vmatpush1.msra.mxu0 0.0
    %129 = vmatprep.subr.mxu0 0.0
    %130 = vmatpush1.msra.mxu0 0.0
    %131 = vmatprep.subr.mxu0 0.0
    %132 = vmatpush1.msra.mxu0 0.0
    %133 = vmatprep.subr.mxu0 0.0
    %134 = vmatpush1.msra.mxu0 0.0
    %135 = vmatprep.subr.mxu0 0.0
    %136 = vmatpush1.msra.mxu0 0.0
    %137 = vmatprep.subr.mxu0 0.0
    %138 = vmatpush1.msra.mxu0 0.0
    %139 = vmatprep.subr.mxu0 0.0
    %140 = vmatpush1.msra.mxu0 0.0
    %141 = vmatprep.subr.mxu0 0.0
    %142 = vmatpush1.msra.mxu0 0.0
    %143 = vmatprep.subr.mxu0 0.0
    %144 = vmatpush1.msra.mxu0 0.0
    %145 = vmatprep.subr.mxu0 0.0
    %146 = vmatpush1.msra.mxu0 0.0
    %147 = vmatprep.subr.mxu0 0.0
    %148 = vmatpush1.msra.mxu0 0.0
    %149 = vmatprep.subr.mxu0 0.0
    %150 = vmatpush1.msra.mxu0 0.0
    %151 = vmatprep.subr.mxu0 0.0
    %152 = vmatpush1.msra.mxu0 0.0
    %153 = vmatprep.subr.mxu0 0.0
    %154 = vmatpush1.msra.mxu0 0.0
    %155 = vmatprep.subr.mxu0 0.0
    %156 = vmatpush1.msra.mxu0 0.0
    %157 = vmatprep.subr.mxu0 0.0
    %158 = vmatpush1.msra.mxu0 0.0
    %159 = vmatprep.subr.mxu0 0.0
    %160 = vmatpush1.msra.mxu0 0.0
    %161 = vmatprep.subr.mxu0 0.0
    %162 = vmatpush1.msra.mxu0 0.0
    %163 = vmatprep.subr.mxu0 0.0
    %164 = vmatpush1.msra.mxu0 0.0
    %165 = vmatprep.subr.mxu0 0.0
    %166 = vmatpush1.msra.mxu0 0.0
    %167 = vmatprep.mubr.f32.mxu0 0.0
    %168 = vmatmul.mubr.f32.gmra.mrb[0].mxu0 %v98
    %v169 = vpop.f32.mrb[0].mxu0
    %v170 = vadd.f32 0.0, %v169
    %v171 = vpop.f32.mrb[0].mxu0
    %172 = vmatprep.mubr.f32.mxu0 0.0
    %173 = vmatmul.mubr.f32.gmra.mrb[0].mxu0 %v101
    %v174 = vpop.f32.mrb[0].mxu0
    %v175 = vadd.f32 0.0, %v174
    %v176 = vpop.f32.mrb[0].mxu0
    %177 = vdwg.mxu0
    %178 = vst [vmem:[#allocation12] sm:$0xff] %v170
    %179 = vst [vmem:[#allocation12 + $0x8] sm:$0xff] %v175
    %v180 = vld [vmem:[#allocation2] sm:$0xff]
    loop: start=0, step=1, limit=4
    $region42: #{tpu_custom_call.1} parent=1 // loop_pre_header
      _
    $region43: #{tpu_custom_call.1} parent=1 // loop_header
      %s182 = sphi 0, %s186
      %p183 = scmp.ge.s32.totalorder %s182, 4
      %v187 = vphi 0.0, %v674
      %v188 = vphi 0.0, %v675
    $region44: #{tpu_custom_call.1} parent=1 // loop_header_branch
      %185 = sbr.rel (%p183) target = $region48
    $region45: #{tpu_custom_call.1} parent=1 // loop_body
      %s189 = smul.u32 %s182, 32
      %s190 = scalar_lea.vmem [#allocation8], %s189
      %v191 = vld [vmem:[%s190] sm:$0xff]
      %v192 = vld [vmem:[%s190 + $0x8] sm:$0xff]
      %v193 = vld [vmem:[%s190 + $0x10] sm:$0xff]
      %v194 = vld [vmem:[%s190 + $0x18] sm:$0xff]
      %195 = vmatprep.subr.mxu0 0.0
      %196 = vmatpush1.msra.mxu0 %v191
      %197 = vmatprep.subr.mxu0 0.0
      %198 = vmatpush1.msra.mxu0 %v192
      %199 = vmatprep.subr.mxu0 0.0
      %200 = vmatpush1.msra.mxu0 %v193
      %201 = vmatprep.subr.mxu0 0.0
      %202 = vmatpush1.msra.mxu0 %v194
      %203 = vmatprep.subr.mxu0 0.0
      %204 = vmatpush1.msra.mxu0 0.0
      %205 = vmatprep.subr.mxu0 0.0
      %206 = vmatpush1.msra.mxu0 0.0
      %207 = vmatprep.subr.mxu0 0.0
      %208 = vmatpush1.msra.mxu0 0.0
      %209 = vmatprep.subr.mxu0 0.0
      %210 = vmatpush1.msra.mxu0 0.0
      %211 = vmatprep.subr.mxu0 0.0
      %212 = vmatpush1.msra.mxu0 0.0
      %213 = vmatprep.subr.mxu0 0.0
      %214 = vmatpush1.msra.mxu0 0.0
      %215 = vmatprep.subr.mxu0 0.0
      %216 = vmatpush1.msra.mxu0 0.0
      %217 = vmatprep.subr.mxu0 0.0
      %218 = vmatpush1.msra.mxu0 0.0
      %219 = vmatprep.subr.mxu0 0.0
      %220 = vmatpush1.msra.mxu0 0.0
      %221 = vmatprep.subr.mxu0 0.0
      %222 = vmatpush1.msra.mxu0 0.0
      %223 = vmatprep.subr.mxu0 0.0
      %224 = vmatpush1.msra.mxu0 0.0
      %225 = vmatprep.subr.mxu0 0.0
      %226 = vmatpush1.msra.mxu0 0.0
      %227 = vmatprep.subr.mxu0 0.0
      %228 = vmatpush1.msra.mxu0 0.0
      %229 = vmatprep.subr.mxu0 0.0
      %230 = vmatpush1.msra.mxu0 0.0
      %231 = vmatprep.subr.mxu0 0.0
      %232 = vmatpush1.msra.mxu0 0.0
      %233 = vmatprep.subr.mxu0 0.0
      %234 = vmatpush1.msra.mxu0 0.0
      %235 = vmatprep.subr.mxu0 0.0
      %236 = vmatpush1.msra.mxu0 0.0
      %237 = vmatprep.subr.mxu0 0.0
      %238 = vmatpush1.msra.mxu0 0.0
      %239 = vmatprep.subr.mxu0 0.0
      %240 = vmatpush1.msra.mxu0 0.0
      %241 = vmatprep.subr.mxu0 0.0
      %242 = vmatpush1.msra.mxu0 0.0
      %243 = vmatprep.subr.mxu0 0.0
      %244 = vmatpush1.msra.mxu0 0.0
      %245 = vmatprep.subr.mxu0 0.0
      %246 = vmatpush1.msra.mxu0 0.0
      %247 = vmatprep.subr.mxu0 0.0
      %248 = vmatpush1.msra.mxu0 0.0
      %249 = vmatprep.subr.mxu0 0.0
      %250 = vmatpush1.msra.mxu0 0.0
      %251 = vmatprep.subr.mxu0 0.0
      %252 = vmatpush1.msra.mxu0 0.0
      %253 = vmatprep.subr.mxu0 0.0
      %254 = vmatpush1.msra.mxu0 0.0
      %255 = vmatprep.subr.mxu0 0.0
      %256 = vmatpush1.msra.mxu0 0.0
      %257 = vmatprep.subr.mxu0 0.0
      %258 = vmatpush1.msra.mxu0 0.0
      %259 = vmatprep.mubr.f32.mxu0 0.0
      %260 = vmatmul.mubr.f32.gmra.mrb[0].mxu0 %v98
      %v261 = vpop.f32.mrb[0].mxu0
      %v262 = vadd.f32 0.0, %v261
      %v263 = vpop.f32.mrb[0].mxu0
      %264 = vmatprep.mubr.f32.mxu0 0.0
      %265 = vmatmul.mubr.f32.gmra.mrb[0].mxu0 %v101
      %v266 = vpop.f32.mrb[0].mxu0
      %v267 = vadd.f32 0.0, %v266
      %v268 = vpop.f32.mrb[0].mxu0
      %269 = vdwg.mxu0
      %270 = vmatprep.subr.mxu0 0.0
      %271 = vmatpush1.xpose.msra.mxu0 %v170
      %272 = vmatprep.subr.mxu0 0.0
      %273 = vmatpush1.xpose.msra.mxu0 0.0
      %274 = vmatprep.subr.mxu0 0.0
      %275 = vmatpush1.xpose.msra.mxu0 0.0
      %276 = vmatprep.subr.mxu0 0.0
      %277 = vmatpush1.xpose.msra.mxu0 0.0
      %278 = vmatprep.subr.mxu0 0.0
      %279 = vmatpush1.xpose.msra.mxu0 0.0
      %280 = vmatprep.subr.mxu0 0.0
      %281 = vmatpush1.xpose.msra.mxu0 0.0
      %282 = vmatprep.subr.mxu0 0.0
      %283 = vmatpush1.xpose.msra.mxu0 0.0
      %284 = vmatprep.subr.mxu0 0.0
      %285 = vmatpush1.xpose.msra.mxu0 0.0
      %286 = vmatprep.subr.mxu0 0.0
      %287 = vmatpush1.xpose.msra.mxu0 0.0
      %288 = vmatprep.subr.mxu0 0.0
      %289 = vmatpush1.xpose.msra.mxu0 0.0
      %290 = vmatprep.subr.mxu0 0.0
      %291 = vmatpush1.xpose.msra.mxu0 0.0
      %292 = vmatprep.subr.mxu0 0.0
      %293 = vmatpush1.xpose.msra.mxu0 0.0
      %294 = vmatprep.subr.mxu0 0.0
      %295 = vmatpush1.xpose.msra.mxu0 0.0
      %296 = vmatprep.subr.mxu0 0.0
      %297 = vmatpush1.xpose.msra.mxu0 0.0
      %298 = vmatprep.subr.mxu0 0.0
      %299 = vmatpush1.xpose.msra.mxu0 0.0
      %300 = vmatprep.subr.mxu0 0.0
      %301 = vmatpush1.xpose.msra.mxu0 0.0
      %302 = vmatprep.subr.mxu0 0.0
      %303 = vmatpush1.xpose.msra.mxu0 0.0
      %304 = vmatprep.subr.mxu0 0.0
      %305 = vmatpush1.xpose.msra.mxu0 0.0
      %306 = vmatprep.subr.mxu0 0.0
      %307 = vmatpush1.xpose.msra.mxu0 0.0
      %308 = vmatprep.subr.mxu0 0.0
      %309 = vmatpush1.xpose.msra.mxu0 0.0
      %310 = vmatprep.subr.mxu0 0.0
      %311 = vmatpush1.xpose.msra.mxu0 0.0
      %312 = vmatprep.subr.mxu0 0.0
      %313 = vmatpush1.xpose.msra.mxu0 0.0
      %314 = vmatprep.subr.mxu0 0.0
      %315 = vmatpush1.xpose.msra.mxu0 0.0
      %316 = vmatprep.subr.mxu0 0.0
      %317 = vmatpush1.xpose.msra.mxu0 0.0
      %318 = vmatprep.subr.mxu0 0.0
      %319 = vmatpush1.xpose.msra.mxu0 0.0
      %320 = vmatprep.subr.mxu0 0.0
      %321 = vmatpush1.xpose.msra.mxu0 0.0
      %322 = vmatprep.subr.mxu0 0.0
      %323 = vmatpush1.xpose.msra.mxu0 0.0
      %324 = vmatprep.subr.mxu0 0.0
      %325 = vmatpush1.xpose.msra.mxu0 0.0
      %326 = vmatprep.subr.mxu0 0.0
      %327 = vmatpush1.xpose.msra.mxu0 0.0
      %328 = vmatprep.subr.mxu0 0.0
      %329 = vmatpush1.xpose.msra.mxu0 0.0
      %330 = vmatprep.subr.mxu0 0.0
      %331 = vmatpush1.xpose.msra.mxu0 0.0
      %332 = vmatprep.subr.mxu0 0.0
      %333 = vmatpush1.xpose.msra.mxu0 0.0
      %334 = vmatprep.mubr.f32.mxu0 0.0
      %335 = vmatmul.mubr.f32.gmra.mrb[0].mxu0 %v262
      %v336 = vpop.f32.mrb[0].mxu0
      %v337 = vadd.f32 0.0, %v336
      %v338 = vpop.f32.mrb[0].mxu0
      %339 = vdwg.mxu0
      %340 = vmatprep.subr.mxu0 0.0
      %341 = vmatpush1.xpose.msra.mxu0 %v175
      %342 = vmatprep.subr.mxu0 0.0
      %343 = vmatpush1.xpose.msra.mxu0 0.0
      %344 = vmatprep.subr.mxu0 0.0
      %345 = vmatpush1.xpose.msra.mxu0 0.0
      %346 = vmatprep.subr.mxu0 0.0
      %347 = vmatpush1.xpose.msra.mxu0 0.0
      %348 = vmatprep.subr.mxu0 0.0
      %349 = vmatpush1.xpose.msra.mxu0 0.0
      %350 = vmatprep.subr.mxu0 0.0
      %351 = vmatpush1.xpose.msra.mxu0 0.0
      %352 = vmatprep.subr.mxu0 0.0
      %353 = vmatpush1.xpose.msra.mxu0 0.0
      %354 = vmatprep.subr.mxu0 0.0
      %355 = vmatpush1.xpose.msra.mxu0 0.0
      %356 = vmatprep.subr.mxu0 0.0
      %357 = vmatpush1.xpose.msra.mxu0 0.0
      %358 = vmatprep.subr.mxu0 0.0
      %359 = vmatpush1.xpose.msra.mxu0 0.0
      %360 = vmatprep.subr.mxu0 0.0
      %361 = vmatpush1.xpose.msra.mxu0 0.0
      %362 = vmatprep.subr.mxu0 0.0
      %363 = vmatpush1.xpose.msra.mxu0 0.0
      %364 = vmatprep.subr.mxu0 0.0
      %365 = vmatpush1.xpose.msra.mxu0 0.0
      %366 = vmatprep.subr.mxu0 0.0
      %367 = vmatpush1.xpose.msra.mxu0 0.0
      %368 = vmatprep.subr.mxu0 0.0
      %369 = vmatpush1.xpose.msra.mxu0 0.0
      %370 = vmatprep.subr.mxu0 0.0
      %371 = vmatpush1.xpose.msra.mxu0 0.0
      %372 = vmatprep.subr.mxu0 0.0
      %373 = vmatpush1.xpose.msra.mxu0 0.0
      %374 = vmatprep.subr.mxu0 0.0
      %375 = vmatpush1.xpose.msra.mxu0 0.0
      %376 = vmatprep.subr.mxu0 0.0
      %377 = vmatpush1.xpose.msra.mxu0 0.0
      %378 = vmatprep.subr.mxu0 0.0
      %379 = vmatpush1.xpose.msra.mxu0 0.0
      %380 = vmatprep.subr.mxu0 0.0
      %381 = vmatpush1.xpose.msra.mxu0 0.0
      %382 = vmatprep.subr.mxu0 0.0
      %383 = vmatpush1.xpose.msra.mxu0 0.0
      %384 = vmatprep.subr.mxu0 0.0
      %385 = vmatpush1.xpose.msra.mxu0 0.0
      %386 = vmatprep.subr.mxu0 0.0
      %387 = vmatpush1.xpose.msra.mxu0 0.0
      %388 = vmatprep.subr.mxu0 0.0
      %389 = vmatpush1.xpose.msra.mxu0 0.0
      %390 = vmatprep.subr.mxu0 0.0
      %391 = vmatpush1.xpose.msra.mxu0 0.0
      %392 = vmatprep.subr.mxu0 0.0
      %393 = vmatpush1.xpose.msra.mxu0 0.0
      %394 = vmatprep.subr.mxu0 0.0
      %395 = vmatpush1.xpose.msra.mxu0 0.0
      %396 = vmatprep.subr.mxu0 0.0
      %397 = vmatpush1.xpose.msra.mxu0 0.0
      %398 = vmatprep.subr.mxu0 0.0
      %399 = vmatpush1.xpose.msra.mxu0 0.0
      %400 = vmatprep.subr.mxu0 0.0
      %401 = vmatpush1.xpose.msra.mxu0 0.0
      %402 = vmatprep.subr.mxu0 0.0
      %403 = vmatpush1.xpose.msra.mxu0 0.0
      %404 = vmatprep.mubr.f32.mxu0 0.0
      %405 = vmatmul.mubr.f32.gmra.mrb[0].mxu0 %v267
      %v406 = vpop.f32.mrb[0].mxu0
      %v407 = vadd.f32 0.0, %v406
      %v408 = vpop.f32.mrb[0].mxu0
      %409 = vdwg.mxu0
      %v410 = vmul.f32 %v337, %v180
      %v411 = vmul.f32 %v407, %v180
      %vm412 = vcmask 64512
      %v413 = vsel %vm412, %v410, -inf
      %414 = vmax.xlane.f32.xlu0 %v413
      %v415 = vpop.xlane.xlu0 %414
      %v416 = vsel %vm412, %v411, -inf
      %417 = vmax.xlane.f32.xlu0 %v416
      %v418 = vpop.xlane.xlu0 %417
      %v419 = vsub.f32 %v410, %v415
      %v420 = vsub.f32 %v411, %v418
      %v421 = vmul.f32 %v419, 1.442695
      %v422 = vpow.pop %v421
      %v423 = vmul.f32 %v420, 1.442695
      %v424 = vpow.pop %v423
      %v425 = vsel %vm412, %v422, 0.0
      %426 = vadd.xlane.f32.xlu0 %v425
      %v427 = vpop.xlane.xlu0 %426
      %v428 = vsel %vm412, %v424, 0.0
      %429 = vadd.xlane.f32.xlu0 %v428
      %v430 = vpop.xlane.xlu0 %429
      %v431 = vrcp.pop %v427
      %v432 = vrcp.pop %v430
      %v433 = vmul.f32 %v422, %v431
      %v434 = vmul.f32 %v424, %v432
      %v436 = vsel %vm412, %v433, 0
      %438 = vmatprep.subr.mxu0 0.0
      %439 = vmatpush1.msra.mxu0 %v170
      %440 = vmatprep.subr.mxu0 0.0
      %441 = vmatpush1.msra.mxu0 0.0
      %442 = vmatprep.subr.mxu0 0.0
      %443 = vmatpush1.msra.mxu0 0.0
      %444 = vmatprep.subr.mxu0 0.0
      %445 = vmatpush1.msra.mxu0 0.0
      %446 = vmatprep.subr.mxu0 0.0
      %447 = vmatpush1.msra.mxu0 0.0
      %448 = vmatprep.subr.mxu0 0.0
      %449 = vmatpush1.msra.mxu0 0.0
      %450 = vmatprep.subr.mxu0 0.0
      %451 = vmatpush1.msra.mxu0 0.0
      %452 = vmatprep.subr.mxu0 0.0
      %453 = vmatpush1.msra.mxu0 0.0
      %454 = vmatprep.subr.mxu0 0.0
      %455 = vmatpush1.msra.mxu0 0.0
      %456 = vmatprep.subr.mxu0 0.0
      %457 = vmatpush1.msra.mxu0 0.0
      %458 = vmatprep.subr.mxu0 0.0
      %459 = vmatpush1.msra.mxu0 0.0
      %460 = vmatprep.subr.mxu0 0.0
      %461 = vmatpush1.msra.mxu0 0.0
      %462 = vmatprep.subr.mxu0 0.0
      %463 = vmatpush1.msra.mxu0 0.0
      %464 = vmatprep.subr.mxu0 0.0
      %465 = vmatpush1.msra.mxu0 0.0
      %466 = vmatprep.subr.mxu0 0.0
      %467 = vmatpush1.msra.mxu0 0.0
      %468 = vmatprep.subr.mxu0 0.0
      %469 = vmatpush1.msra.mxu0 0.0
      %470 = vmatprep.subr.mxu0 0.0
      %471 = vmatpush1.msra.mxu0 0.0
      %472 = vmatprep.subr.mxu0 0.0
      %473 = vmatpush1.msra.mxu0 0.0
      %474 = vmatprep.subr.mxu0 0.0
      %475 = vmatpush1.msra.mxu0 0.0
      %476 = vmatprep.subr.mxu0 0.0
      %477 = vmatpush1.msra.mxu0 0.0
      %478 = vmatprep.subr.mxu0 0.0
      %479 = vmatpush1.msra.mxu0 0.0
      %480 = vmatprep.subr.mxu0 0.0
      %481 = vmatpush1.msra.mxu0 0.0
      %482 = vmatprep.subr.mxu0 0.0
      %483 = vmatpush1.msra.mxu0 0.0
      %484 = vmatprep.subr.mxu0 0.0
      %485 = vmatpush1.msra.mxu0 0.0
      %486 = vmatprep.subr.mxu0 0.0
      %487 = vmatpush1.msra.mxu0 0.0
      %488 = vmatprep.subr.mxu0 0.0
      %489 = vmatpush1.msra.mxu0 0.0
      %490 = vmatprep.subr.mxu0 0.0
      %491 = vmatpush1.msra.mxu0 0.0
      %492 = vmatprep.subr.mxu0 0.0
      %493 = vmatpush1.msra.mxu0 0.0
      %494 = vmatprep.subr.mxu0 0.0
      %495 = vmatpush1.msra.mxu0 0.0
      %496 = vmatprep.subr.mxu0 0.0
      %497 = vmatpush1.msra.mxu0 0.0
      %498 = vmatprep.subr.mxu0 0.0
      %499 = vmatpush1.msra.mxu0 0.0
      %500 = vmatprep.subr.mxu0 0.0
      %501 = vmatpush1.msra.mxu0 0.0
      %502 = vmatprep.mubr.f32.mxu0 0.0
      %503 = vmatmul.mubr.f32.gmra.mrb[0].mxu0 %v436
      %v504 = vpop.f32.mrb[0].mxu0
      %v505 = vadd.f32 0.0, %v504
      %v506 = vpop.f32.mrb[0].mxu0
      %507 = vdwg.mxu0
      %v509 = vsel %vm412, %v434, 0
      %511 = vmatprep.subr.mxu0 0.0
      %512 = vmatpush1.msra.mxu0 %v175
      %513 = vmatprep.subr.mxu0 0.0
      %514 = vmatpush1.msra.mxu0 0.0
      %515 = vmatprep.subr.mxu0 0.0
      %516 = vmatpush1.msra.mxu0 0.0
      %517 = vmatprep.subr.mxu0 0.0
      %518 = vmatpush1.msra.mxu0 0.0
      %519 = vmatprep.subr.mxu0 0.0
      %520 = vmatpush1.msra.mxu0 0.0
      %521 = vmatprep.subr.mxu0 0.0
      %522 = vmatpush1.msra.mxu0 0.0
      %523 = vmatprep.subr.mxu0 0.0
      %524 = vmatpush1.msra.mxu0 0.0
      %525 = vmatprep.subr.mxu0 0.0
      %526 = vmatpush1.msra.mxu0 0.0
      %527 = vmatprep.subr.mxu0 0.0
      %528 = vmatpush1.msra.mxu0 0.0
      %529 = vmatprep.subr.mxu0 0.0
      %530 = vmatpush1.msra.mxu0 0.0
      %531 = vmatprep.subr.mxu0 0.0
      %532 = vmatpush1.msra.mxu0 0.0
      %533 = vmatprep.subr.mxu0 0.0
      %534 = vmatpush1.msra.mxu0 0.0
      %535 = vmatprep.subr.mxu0 0.0
      %536 = vmatpush1.msra.mxu0 0.0
      %537 = vmatprep.subr.mxu0 0.0
      %538 = vmatpush1.msra.mxu0 0.0
      %539 = vmatprep.subr.mxu0 0.0
      %540 = vmatpush1.msra.mxu0 0.0
      %541 = vmatprep.subr.mxu0 0.0
      %542 = vmatpush1.msra.mxu0 0.0
      %543 = vmatprep.subr.mxu0 0.0
      %544 = vmatpush1.msra.mxu0 0.0
      %545 = vmatprep.subr.mxu0 0.0
      %546 = vmatpush1.msra.mxu0 0.0
      %547 = vmatprep.subr.mxu0 0.0
      %548 = vmatpush1.msra.mxu0 0.0
      %549 = vmatprep.subr.mxu0 0.0
      %550 = vmatpush1.msra.mxu0 0.0
      %551 = vmatprep.subr.mxu0 0.0
      %552 = vmatpush1.msra.mxu0 0.0
      %553 = vmatprep.subr.mxu0 0.0
      %554 = vmatpush1.msra.mxu0 0.0
      %555 = vmatprep.subr.mxu0 0.0
      %556 = vmatpush1.msra.mxu0 0.0
      %557 = vmatprep.subr.mxu0 0.0
      %558 = vmatpush1.msra.mxu0 0.0
      %559 = vmatprep.subr.mxu0 0.0
      %560 = vmatpush1.msra.mxu0 0.0
      %561 = vmatprep.subr.mxu0 0.0
      %562 = vmatpush1.msra.mxu0 0.0
      %563 = vmatprep.subr.mxu0 0.0
      %564 = vmatpush1.msra.mxu0 0.0
      %565 = vmatprep.subr.mxu0 0.0
      %566 = vmatpush1.msra.mxu0 0.0
      %567 = vmatprep.subr.mxu0 0.0
      %568 = vmatpush1.msra.mxu0 0.0
      %569 = vmatprep.subr.mxu0 0.0
      %570 = vmatpush1.msra.mxu0 0.0
      %571 = vmatprep.subr.mxu0 0.0
      %572 = vmatpush1.msra.mxu0 0.0
      %573 = vmatprep.subr.mxu0 0.0
      %574 = vmatpush1.msra.mxu0 0.0
      %575 = vmatprep.mubr.f32.mxu0 0.0
      %576 = vmatmul.mubr.f32.gmra.mrb[0].mxu0 %v509
      %v577 = vpop.f32.mrb[0].mxu0
      %v578 = vadd.f32 0.0, %v577
      %v579 = vpop.f32.mrb[0].mxu0
      %580 = vdwg.mxu0
      %s581 = smul.u32 %s182, 128
      %s582 = scalar_lea.vmem [#allocation10], %s581
      %v583 = vld [vmem:[%s582] sm:$0xff]
      %v584 = vld [vmem:[%s582 + $0x8] sm:$0xff]
      %v585 = vld [vmem:[%s582 + $0x10] sm:$0xff]
      %v586 = vld [vmem:[%s582 + $0x18] sm:$0xff]
      %v587 = vld [vmem:[%s582 + $0x20] sm:$0xff]
      %v588 = vld [vmem:[%s582 + $0x28] sm:$0xff]
      %v589 = vld [vmem:[%s582 + $0x30] sm:$0xff]
      %v590 = vld [vmem:[%s582 + $0x38] sm:$0xff]
      %v591 = vld [vmem:[%s582 + $0x40] sm:$0xff]
      %v592 = vld [vmem:[%s582 + $0x48] sm:$0xff]
      %v593 = vld [vmem:[%s582 + $0x50] sm:$0xff]
      %v594 = vld [vmem:[%s582 + $0x58] sm:$0xff]
      %v595 = vld [vmem:[%s582 + $0x60] sm:$0xff]
      %v596 = vld [vmem:[%s582 + $0x68] sm:$0xff]
      %v597 = vld [vmem:[%s582 + $0x70] sm:$0xff]
      %v598 = vld [vmem:[%s582 + $0x78] sm:$0xff]
      %599 = vmatprep.subr.mxu0 0.0
      %600 = vmatpush1.msra.mxu0 %v583
      %601 = vmatprep.subr.mxu0 0.0
      %602 = vmatpush1.msra.mxu0 %v584
      %603 = vmatprep.subr.mxu0 0.0
      %604 = vmatpush1.msra.mxu0 %v585
      %605 = vmatprep.subr.mxu0 0.0
      %606 = vmatpush1.msra.mxu0 %v586
      %607 = vmatprep.subr.mxu0 0.0
      %608 = vmatpush1.msra.mxu0 %v587
      %609 = vmatprep.subr.mxu0 0.0
      %610 = vmatpush1.msra.mxu0 %v588
      %611 = vmatprep.subr.mxu0 0.0
      %612 = vmatpush1.msra.mxu0 %v589
      %613 = vmatprep.subr.mxu0 0.0
      %614 = vmatpush1.msra.mxu0 %v590
      %615 = vmatprep.subr.mxu0 0.0
      %616 = vmatpush1.msra.mxu0 %v591
      %617 = vmatprep.subr.mxu0 0.0
      %618 = vmatpush1.msra.mxu0 %v592
      %619 = vmatprep.subr.mxu0 0.0
      %620 = vmatpush1.msra.mxu0 %v593
      %621 = vmatprep.subr.mxu0 0.0
      %622 = vmatpush1.msra.mxu0 %v594
      %623 = vmatprep.subr.mxu0 0.0
      %624 = vmatpush1.msra.mxu0 %v595
      %625 = vmatprep.subr.mxu0 0.0
      %626 = vmatpush1.msra.mxu0 %v596
      %627 = vmatprep.subr.mxu0 0.0
      %628 = vmatpush1.msra.mxu0 %v597
      %629 = vmatprep.subr.mxu0 0.0
      %630 = vmatpush1.msra.mxu0 %v598
      %631 = vmatprep.subr.mxu0 0.0
      %632 = vmatpush1.msra.mxu0 0.0
      %633 = vmatprep.subr.mxu0 0.0
      %634 = vmatpush1.msra.mxu0 0.0
      %635 = vmatprep.subr.mxu0 0.0
      %636 = vmatpush1.msra.mxu0 0.0
      %637 = vmatprep.subr.mxu0 0.0
      %638 = vmatpush1.msra.mxu0 0.0
      %639 = vmatprep.subr.mxu0 0.0
      %640 = vmatpush1.msra.mxu0 0.0
      %641 = vmatprep.subr.mxu0 0.0
      %642 = vmatpush1.msra.mxu0 0.0
      %643 = vmatprep.subr.mxu0 0.0
      %644 = vmatpush1.msra.mxu0 0.0
      %645 = vmatprep.subr.mxu0 0.0
      %646 = vmatpush1.msra.mxu0 0.0
      %647 = vmatprep.subr.mxu0 0.0
      %648 = vmatpush1.msra.mxu0 0.0
      %649 = vmatprep.subr.mxu0 0.0
      %650 = vmatpush1.msra.mxu0 0.0
      %651 = vmatprep.subr.mxu0 0.0
      %652 = vmatpush1.msra.mxu0 0.0
      %653 = vmatprep.subr.mxu0 0.0
      %654 = vmatpush1.msra.mxu0 0.0
      %655 = vmatprep.subr.mxu0 0.0
      %656 = vmatpush1.msra.mxu0 0.0
      %657 = vmatprep.subr.mxu0 0.0
      %658 = vmatpush1.msra.mxu0 0.0
      %659 = vmatprep.subr.mxu0 0.0
      %660 = vmatpush1.msra.mxu0 0.0
      %661 = vmatprep.subr.mxu0 0.0
      %662 = vmatpush1.msra.mxu0 0.0
      %663 = vmatprep.mubr.f32.mxu0 0.0
      %664 = vmatmul.mubr.f32.gmra.mrb[0].mxu0 %v505
      %v665 = vpop.f32.mrb[0].mxu0
      %v666 = vadd.f32 0.0, %v665
      %v667 = vpop.f32.mrb[0].mxu0
      %668 = vmatprep.mubr.f32.mxu0 0.0
      %669 = vmatmul.mubr.f32.gmra.mrb[0].mxu0 %v578
      %v670 = vpop.f32.mrb[0].mxu0
      %v671 = vadd.f32 0.0, %v670
      %v672 = vpop.f32.mrb[0].mxu0
      %673 = vdwg.mxu0
      %v674 = vadd.f32 %v187, %v666
      %v675 = vadd.f32 %v188, %v671
    $region46: #{tpu_custom_call.1} parent=1 // loop_footer
      %s186 = sadd.s32 1, %s182
    $region47: #{tpu_custom_call.1} parent=1 // loop_footer_branch
      %181 = sbr.rel target = $region43
    $region48: #{tpu_custom_call.1} parent=1 // loop_exit
      _
    %676 = vst [vmem:[#allocation11] sm:$0xff] %v187
    %677 = vst [vmem:[#allocation11 + $0x8] sm:$0xff] %v188
    // Predicated region
    $region49: #{tpu_custom_call.1} parent=1 // pred_check
      _
    $region50: #{tpu_custom_call.1} parent=1 // pred_check_branch
      %679 = sbr.rel (0) target = $region52
    $region51: #{tpu_custom_call.1} parent=1 // pred_region
      %s681 = ssub.s32 256, 256
      %682 = vsyncadd [#allocation4], %s681
      %s683 = sshll.u32 [#allocation11], 4
      %s684 = int_to_ptr.vmem [resolvable:$true] %s683
      %689 = dma.vmem_to_hbm [thread:$0]  %s684, 256, %s5, [#allocation4], 128, 128, 8
    $region52: #{tpu_custom_call.1} parent=1 // pred_fallthru
      _
    // Predicated region
    $region53: #{tpu_custom_call.1} parent=1 // pred_check
      _
    $region54: #{tpu_custom_call.1} parent=1 // pred_check_branch
      %691 = sbr.rel (0) target = $region56
    $region55: #{tpu_custom_call.1} parent=1 // pred_region
      %s693 = ssub.s32 256, 256
      %694 = vsyncadd [#allocation13], %s693
      %s695 = sshll.u32 [#allocation12], 4
      %s696 = int_to_ptr.vmem [resolvable:$true] %s695
      %701 = dma.vmem_to_hbm [thread:$0]  %s696, 256, %s6, [#allocation13], 128, 128, 8
    $region56: #{tpu_custom_call.1} parent=1 // pred_fallthru
      _
    // Predicated region
    $region57: #{tpu_custom_call.1} parent=1 // pred_check
      _
    $region58: #{tpu_custom_call.1} parent=1 // pred_check_branch
      %703 = sbr.rel (0) target = $region60
    $region59: #{tpu_custom_call.1} parent=1 // pred_region
      %704 = dma.done [#allocation4], 256
    $region60: #{tpu_custom_call.1} parent=1 // pred_fallthru
      _
    // Predicated region
    $region61: #{tpu_custom_call.1} parent=1 // pred_check
      _
    $region62: #{tpu_custom_call.1} parent=1 // pred_check_branch
      %706 = sbr.rel (0) target = $region64
    $region63: #{tpu_custom_call.1} parent=1 // pred_region
      %707 = dma.done [#allocation13], 256
    $region64: #{tpu_custom_call.1} parent=1 // pred_fallthru
      _
    %708 = vsyncpa [#allocation3], 1
    %709 = vsyncpa [#allocation6], 1
    %710 = vsyncpa [#allocation9], 1
    %711 = vsyncpa [#allocation4], 1
    %712 = vsyncpa [#allocation13], 1

</llo_original>
